<compile_context>
chip_gen: v6e
topology: v6e:2x2x1
jax: 0.10.0
libtpu: 0.0.40
codegen_flags: <defaults>
</compile_context>

<pallas_src>
import jax
import jax.numpy as jnp
from jax.experimental import pallas as pl
from jax.experimental.pallas import tpu as pltpu

_LANE = 128


def _fre_ri_conv_kernel(xr_ref, xi_ref, wr_ref, wi_ref, br_ref, bi_ref,
                        yr_ref, yi_ref):
    # 1x1 conv over channels with the spatial axis on lanes:
    #   y[o, t] = relu( sum_i w[o, i] * x[i, t] + b[o] )
    xr = xr_ref[0]                                   # (C, T), lane-dense
    xi = xi_ref[0]
    yr = jnp.dot(wr_ref[...], xr, preferred_element_type=jnp.float32) + br_ref[...]
    yi = jnp.dot(wi_ref[...], xi, preferred_element_type=jnp.float32) + bi_ref[...]
    # BasicConv default relu=True -> ReLU after conv.
    yr_ref[0] = jnp.maximum(yr, 0.0).astype(yr_ref.dtype)
    yi_ref[0] = jnp.maximum(yi, 0.0).astype(yi_ref.dtype)


def _pick_tile(hw, c, vmem_budget_bytes):
    # 8 live tile buffers (2 inputs + 2 outputs, double-buffered), f32.
    for t in (4096, 2048, 1024, 512, 256, 128):
        if hw % t == 0 and 8 * c * t * 4 <= vmem_budget_bytes:
            return t
    return None


def _conv1x1_real_imag(xr, xi, wr, br, wi, bi):
    """xr, xi: (N, C, HW) float32 (spatial last = lane-dense).
    wr, wi: (C_out, C_in) conv weights.  br, bi: (C,) biases."""
    N, C, HW = xr.shape

    vmem_budget = 24 * 1024 * 1024            # headroom under the 48 MiB limit
    t_hw = _pick_tile(HW, C, vmem_budget)
    hw_pad = HW
    if t_hw is None:
        # Pad the spatial (lane) axis so a 128-divisible tile exists; padded
        # columns are sliced off after the kernel.
        hw_pad = -(-HW // _LANE) * _LANE
        xr = jnp.pad(xr, ((0, 0), (0, 0), (0, hw_pad - HW)))
        xi = jnp.pad(xi, ((0, 0), (0, 0), (0, hw_pad - HW)))
        t_hw = _pick_tile(hw_pad, C, vmem_budget)

    grid = (N, hw_pad // t_hw)

    x_spec = pl.BlockSpec((1, C, t_hw), lambda n, j: (n, 0, j))
    w_spec = pl.BlockSpec((C, C), lambda n, j: (0, 0))
    b_spec = pl.BlockSpec((C, 1), lambda n, j: (0, 0))

    flops = 2 * 2 * N * hw_pad * C * C                      # two (C,C)@(C,HW)
    bytes_accessed = (4 * N * C * hw_pad + 2 * C * C + 2 * C) * 4

    yr, yi = pl.pallas_call(
        _fre_ri_conv_kernel,
        out_shape=(jax.ShapeDtypeStruct((N, C, hw_pad), jnp.float32),
                   jax.ShapeDtypeStruct((N, C, hw_pad), jnp.float32)),
        grid_spec=pltpu.PrefetchScalarGridSpec(
            num_scalar_prefetch=0,
            grid=grid,
            in_specs=[x_spec, x_spec, w_spec, w_spec, b_spec, b_spec],
            out_specs=[x_spec, x_spec],
        ),
        compiler_params=pltpu.CompilerParams(
            dimension_semantics=("parallel", "parallel"),
            vmem_limit_bytes=48 * 1024 * 1024,
        ),
        cost_estimate=pl.CostEstimate(flops=flops, transcendentals=0,
                                      bytes_accessed=bytes_accessed),
    )(xr.astype(jnp.float32), xi.astype(jnp.float32),
      wr.astype(jnp.float32), wi.astype(jnp.float32),
      br.reshape(C, 1).astype(jnp.float32), bi.reshape(C, 1).astype(jnp.float32))

    if hw_pad != HW:
        yr = yr[:, :, :HW]
        yi = yi[:, :, :HW]
    return yr, yi


def fre_ri_forward(x, params):
    """x: (N, C, H, W) float32 (NCHW, like the PyTorch module)."""
    N, C, H, W = x.shape
    wr, br, wi, bi = params

    # TODO(synk): FFT/IFFT have no Pallas TPU primitive; kept in plain JAX.
    xf = jnp.fft.fft2(x, norm="backward")
    xr = jnp.real(xf).astype(jnp.float32).reshape(N, C, H * W)   # free reshape
    xi = jnp.imag(xf).astype(jnp.float32).reshape(N, C, H * W)

    yr, yi = _conv1x1_real_imag(xr, xi, wr, br, wi, bi)

    y = jax.lax.complex(yr.reshape(N, C, H, W), yi.reshape(N, C, H, W))
    y = jnp.fft.ifft2(y, axes=(-2, -1), norm="backward")
    return jnp.abs(y)


def init_params(key, channel):
    k1, k2, k3, k4 = jax.random.split(key, 4)
    scale = 1.0 / jnp.sqrt(channel)  # ~ PyTorch Conv2d default uniform bound
    wr = jax.random.uniform(k1, (channel, channel), jnp.float32, -scale, scale)
    br = jax.random.uniform(k2, (channel,), jnp.float32, -scale, scale)
    wi = jax.random.uniform(k3, (channel, channel), jnp.float32, -scale, scale)
    bi = jax.random.uniform(k4, (channel,), jnp.float32, -scale, scale)
    return wr, br, wi, bi


if __name__ == "__main__":
    key = jax.random.PRNGKey(0)
    k_x, k_p = jax.random.split(key)

    N, C, H, W = 2, 4, 16, 16
    x = jax.random.normal(k_x, (N, C, H, W), jnp.float32)
    params = init_params(k_p, C)

    out = jax.block_until_ready(fre_ri_forward(x, params))
    assert out.shape == (N, C, H, W)
    assert out.dtype == jnp.float32
    assert bool(jnp.all(jnp.isfinite(out)))

    # Pure-JAX reference (same FFT glue, einsum for the 1x1 convs).
    wr, br, wi, bi = params
    xf = jnp.fft.fft2(x, norm="backward")
    rr = jnp.maximum(jnp.einsum("oi,nihw->nohw", wr, jnp.real(xf))
                     + br[None, :, None, None], 0.0)
    ri = jnp.maximum(jnp.einsum("oi,nihw->nohw", wi, jnp.imag(xf))
                     + bi[None, :, None, None], 0.0)
    ref = jnp.abs(jnp.fft.ifft2(jax.lax.complex(rr, ri), axes=(-2, -1),
                                norm="backward"))
    assert bool(jnp.allclose(out, ref, rtol=1e-4, atol=1e-4)), \
        float(jnp.max(jnp.abs(out - ref)))

    print("KERNEL_OK")
</pallas_src>

<mosaic_0001>
module attributes {stable_mosaic.version = 11 : i64} {
  func.func @_fre_ri_conv_kernel(%arg0: i32, %arg1: i32, %arg2: memref<1x4x256xf32, #tpu.memory_space<vmem>>, %arg3: memref<1x4x256xf32, #tpu.memory_space<vmem>>, %arg4: memref<4x4xf32, #tpu.memory_space<vmem>>, %arg5: memref<4x4xf32, #tpu.memory_space<vmem>>, %arg6: memref<4x1xf32, #tpu.memory_space<vmem>>, %arg7: memref<4x1xf32, #tpu.memory_space<vmem>>, %arg8: memref<1x4x256xf32, #tpu.memory_space<vmem>>, %arg9: memref<1x4x256xf32, #tpu.memory_space<vmem>>) attributes {dimension_semantics = [#tpu.dimension_semantics<parallel>, #tpu.dimension_semantics<parallel>], iteration_bounds = array<i64: 2, 1>, scalar_prefetch = 0 : i64, scratch_operands = 0 : i64, tpu.core_type = #tpu.core_type<tc>, window_params = [{transform_indices = @transform_0, window_bounds = array<i64: 1, 4, 256>}, {transform_indices = @transform_1, window_bounds = array<i64: 1, 4, 256>}, {pipeline_mode = #tpu.pipeline_mode<synchronous>, transform_indices = @transform_2, window_bounds = array<i64: 4, 4>}, {pipeline_mode = #tpu.pipeline_mode<synchronous>, transform_indices = @transform_3, window_bounds = array<i64: 4, 4>}, {pipeline_mode = #tpu.pipeline_mode<synchronous>, transform_indices = @transform_4, window_bounds = array<i64: 4, 1>}, {pipeline_mode = #tpu.pipeline_mode<synchronous>, transform_indices = @transform_5, window_bounds = array<i64: 4, 1>}, {transform_indices = @transform_6, window_bounds = array<i64: 1, 4, 256>}, {transform_indices = @transform_7, window_bounds = array<i64: 1, 4, 256>}]} {
    %c0 = arith.constant 0 : index
    %c0_0 = arith.constant 0 : index
    %c0_1 = arith.constant 0 : index
    %0 = vector.load %arg2[%c0, %c0_0, %c0_1] : memref<1x4x256xf32, #tpu.memory_space<vmem>>, vector<1x4x256xf32>
    %1 = vector.shape_cast %0 : vector<1x4x256xf32> to vector<4x256xf32>
    %c0_2 = arith.constant 0 : index
    %c0_3 = arith.constant 0 : index
    %c0_4 = arith.constant 0 : index
    %2 = vector.load %arg3[%c0_2, %c0_3, %c0_4] : memref<1x4x256xf32, #tpu.memory_space<vmem>>, vector<1x4x256xf32>
    %3 = vector.shape_cast %2 : vector<1x4x256xf32> to vector<4x256xf32>
    %c0_5 = arith.constant 0 : index
    %c0_6 = arith.constant 0 : index
    %4 = vector.load %arg4[%c0_5, %c0_6] : memref<4x4xf32, #tpu.memory_space<vmem>>, vector<4x4xf32>
    %cst = arith.constant dense<0.000000e+00> : vector<4x256xf32>
    %5 = tpu.matmul %4, %1, %cst {dimension_numbers = #tpu.dot_dimension_numbers<[1], [0], [0], [1], [0, 0, 1, 1], [], []>} : vector<4x4xf32>, vector<4x256xf32>, vector<4x256xf32> -> vector<4x256xf32>
    %c0_7 = arith.constant 0 : index
    %c0_8 = arith.constant 0 : index
    %6 = vector.load %arg6[%c0_7, %c0_8] : memref<4x1xf32, #tpu.memory_space<vmem>>, vector<4x1xf32>
    %7 = vector.broadcast %6 : vector<4x1xf32> to vector<4x256xf32>
    %8 = arith.addf %5, %7 : vector<4x256xf32>
    %c0_9 = arith.constant 0 : index
    %c0_10 = arith.constant 0 : index
    %9 = vector.load %arg5[%c0_9, %c0_10] : memref<4x4xf32, #tpu.memory_space<vmem>>, vector<4x4xf32>
    %cst_11 = arith.constant dense<0.000000e+00> : vector<4x256xf32>
    %10 = tpu.matmul %9, %3, %cst_11 {dimension_numbers = #tpu.dot_dimension_numbers<[1], [0], [0], [1], [0, 0, 1, 1], [], []>} : vector<4x4xf32>, vector<4x256xf32>, vector<4x256xf32> -> vector<4x256xf32>
    %c0_12 = arith.constant 0 : index
    %c0_13 = arith.constant 0 : index
    %11 = vector.load %arg7[%c0_12, %c0_13] : memref<4x1xf32, #tpu.memory_space<vmem>>, vector<4x1xf32>
    %12 = vector.broadcast %11 : vector<4x1xf32> to vector<4x256xf32>
    %13 = arith.addf %10, %12 : vector<4x256xf32>
    %cst_14 = arith.constant 0.000000e+00 : f32
    %14 = vector.broadcast %cst_14 : f32 to vector<4x256xf32>
    %15 = arith.maximumf %8, %14 : vector<4x256xf32>
    %c0_15 = arith.constant 0 : index
    %c0_16 = arith.constant 0 : index
    %c0_17 = arith.constant 0 : index
    %16 = vector.load %arg8[%c0_15, %c0_16, %c0_17] : memref<1x4x256xf32, #tpu.memory_space<vmem>>, vector<1x4x256xf32>
    %17 = vector.shape_cast %16 : vector<1x4x256xf32> to vector<4x256xf32>
    %18 = vector.shape_cast %15 : vector<4x256xf32> to vector<1x4x256xf32>
    tpu.vector_store %arg8[%c0_15, %c0_16, %c0_17], %18 {strides = array<i32>} : memref<1x4x256xf32, #tpu.memory_space<vmem>>, vector<1x4x256xf32>,
    %cst_18 = arith.constant 0.000000e+00 : f32
    %19 = vector.broadcast %cst_18 : f32 to vector<4x256xf32>
    %20 = arith.maximumf %13, %19 : vector<4x256xf32>
    %c0_19 = arith.constant 0 : index
    %c0_20 = arith.constant 0 : index
    %c0_21 = arith.constant 0 : index
    %21 = vector.load %arg9[%c0_19, %c0_20, %c0_21] : memref<1x4x256xf32, #tpu.memory_space<vmem>>, vector<1x4x256xf32>
    %22 = vector.shape_cast %21 : vector<1x4x256xf32> to vector<4x256xf32>
    %23 = vector.shape_cast %20 : vector<4x256xf32> to vector<1x4x256xf32>
    tpu.vector_store %arg9[%c0_19, %c0_20, %c0_21], %23 {strides = array<i32>} : memref<1x4x256xf32, #tpu.memory_space<vmem>>, vector<1x4x256xf32>,
    return
  }
  func.func @transform_0(%arg0: i32, %arg1: i32) -> (i32, i32, i32) {
    %c0_i32 = arith.constant 0 : i32
    %c0_i32_0 = arith.constant 0 : i32
    return %arg0, %c0_i32, %arg1 : i32, i32, i32
  }
  func.func @transform_1(%arg0: i32, %arg1: i32) -> (i32, i32, i32) {
    %c0_i32 = arith.constant 0 : i32
    %c0_i32_0 = arith.constant 0 : i32
    return %arg0, %c0_i32, %arg1 : i32, i32, i32
  }
  func.func @transform_2(%arg0: i32, %arg1: i32) -> (i32, i32) {
    %c0_i32 = arith.constant 0 : i32
    %c0_i32_0 = arith.constant 0 : i32
    %c0_i32_1 = arith.constant 0 : i32
    return %c0_i32, %c0_i32_0 : i32, i32
  }
  func.func @transform_3(%arg0: i32, %arg1: i32) -> (i32, i32) {
    %c0_i32 = arith.constant 0 : i32
    %c0_i32_0 = arith.constant 0 : i32
    %c0_i32_1 = arith.constant 0 : i32
    return %c0_i32, %c0_i32_0 : i32, i32
  }
  func.func @transform_4(%arg0: i32, %arg1: i32) -> (i32, i32) {
    %c0_i32 = arith.constant 0 : i32
    %c0_i32_0 = arith.constant 0 : i32
    %c0_i32_1 = arith.constant 0 : i32
    return %c0_i32, %c0_i32_0 : i32, i32
  }
  func.func @transform_5(%arg0: i32, %arg1: i32) -> (i32, i32) {
    %c0_i32 = arith.constant 0 : i32
    %c0_i32_0 = arith.constant 0 : i32
    %c0_i32_1 = arith.constant 0 : i32
    return %c0_i32, %c0_i32_0 : i32, i32
  }
  func.func @transform_6(%arg0: i32, %arg1: i32) -> (i32, i32, i32) {
    %c0_i32 = arith.constant 0 : i32
    %c0_i32_0 = arith.constant 0 : i32
    return %arg0, %c0_i32, %arg1 : i32, i32, i32
  }
  func.func @transform_7(%arg0: i32, %arg1: i32) -> (i32, i32, i32) {
    %c0_i32 = arith.constant 0 : i32
    %c0_i32_0 = arith.constant 0 : i32
    return %arg0, %c0_i32, %arg1 : i32, i32, i32
  }
}

</mosaic_0001>

<llo_original>
// kernel: tpu_custom_call.1
$region0: #{tpu_custom_call.1}
  #allocation0 [shape = 'u32[]', space=smem, size = 0x4, offset = 0x4, fixed_abs, tag = 'smem constant byte address 0x4 - core index']
  #allocation1 [shape = 'u32[144,128]{1,0:T(1,128)}', space=vmem, size = 0x12000, scoped, tag = 'internal scratch']
  %s0 = inlined_call_operand.hbm [shape: f32[2,4,256], index: 0, kind: input, shape index: {}]
  %s1 = inlined_call_operand.hbm [shape: f32[2,4,256], index: 1, kind: input, shape index: {}]
  %s2 = inlined_call_operand.vmem [shape: f32[4,4], index: 2, kind: input, shape index: {}]
  %s3 = inlined_call_operand.vmem [shape: f32[4,4], index: 3, kind: input, shape index: {}]
  %s4 = inlined_call_operand.vmem [shape: f32[4,1], index: 4, kind: input, shape index: {}]
  %s5 = inlined_call_operand.vmem [shape: f32[4,1], index: 5, kind: input, shape index: {}]
  %s6 = inlined_call_operand.hbm [shape: f32[2,4,256], index: 6, kind: output, shape index: {0}]
  %s7 = inlined_call_operand.hbm [shape: f32[2,4,256], index: 7, kind: output, shape index: {1}]
  %8 = xla_tuple %s6, %s7
  %s9 = sld [smem:[#allocation0]]
  $region73: #{tpu_custom_call.1} parent=0
    _
  %s11 = ssub.s32 1, %s9
  %s12 = scalar_select 0, %s11, %s9
  $region1: #{tpu_custom_call.1} parent=0
    #allocation2 [shape = 'u8[8192]{0}', space=vmem, size = 0x2000, scoped, tag = 'input window, operand 0']
    #allocation3 [shape = 's32[2]{0}', space=sflag, size = 0x8, scoped, tag = 'scoped memory for tpu_custom_call.1']
    #allocation4 [shape = 's32[2]{0}', space=sflag, size = 0x8, scoped, tag = 'scoped memory for tpu_custom_call.1']
    #allocation5 [shape = 'u8[8192]{0}', space=vmem, size = 0x2000, scoped, tag = 'input window, operand 1']
    #allocation6 [shape = 's32[2]{0}', space=sflag, size = 0x8, scoped, tag = 'scoped memory for tpu_custom_call.1']
    #allocation7 [shape = 'u8[8192]{0}', space=vmem, size = 0x2000, scoped, tag = 'output window, operand 0']
    #allocation8 [shape = 'u8[8192]{0}', space=vmem, size = 0x2000, scoped, tag = 'output window, operand 1']
    #allocation9 [shape = 's32[2]{0}', space=sflag, size = 0x8, scoped, tag = 'scoped memory for tpu_custom_call.1']
    %13 = vsyncpa [#allocation3], 0
    %s14 = scalar_lea.sflag [#allocation3], 1
    %15 = vsyncpa %s14, 0
    %16 = vsyncpa [#allocation6], 0
    %s17 = scalar_lea.sflag [#allocation6], 1
    %18 = vsyncpa %s17, 0
    %19 = vsyncpa [#allocation4], 0
    %s20 = scalar_lea.sflag [#allocation4], 1
    %21 = vsyncpa %s20, 0
    %22 = vsyncpa [#allocation9], 0
    %s23 = scalar_lea.sflag [#allocation9], 1
    %24 = vsyncpa %s23, 0
    loop: start=0, step=1, limit=4
    $region2: #{tpu_custom_call.1} parent=1 // loop_pre_header
      _
    $region3: #{tpu_custom_call.1} parent=1 // loop_header
      %s26 = sphi 0, %s30
      %p27 = scmp.ge.s32.totalorder %s26, 4
      %s33 = sphi 0, %s45
      %s34 = sphi 0, %s41
      %s35 = sphi 0, %s33
      %s36 = sphi 0, %s34
      %s37 = sphi 0, %s35
      %s38 = sphi 0, %s36
      %s50 = sphi 0, %s52
      %s53 = sphi 0, %s50
      %s54 = sphi 0, %s53
      %s70 = sphi 0, %s54
      %s78 = sphi 0, %s80
      %s81 = sphi 0, %s78
      %s82 = sphi 0, %s81
      %s98 = sphi 0, %s82
      %s102 = sphi 0, %s102
      %s104 = sphi 0, %s102
      %s105 = sphi 0, %s104
      %s119 = sphi 0, %s105
      %s123 = sphi 0, %s123
      %s125 = sphi 0, %s123
      %s126 = sphi 0, %s125
      %s140 = sphi 0, %s126
      %s144 = sphi 0, %s144
      %s146 = sphi 0, %s144
      %s147 = sphi 0, %s146
      %s161 = sphi 0, %s147
      %s165 = sphi 0, %s165
      %s167 = sphi 0, %s165
      %s168 = sphi 0, %s167
      %s182 = sphi 0, %s168
      %s190 = sphi 0, %s192
      %s193 = sphi 0, %s190
      %s194 = sphi 0, %s193
      %s210 = sphi 0, %s194
      %s218 = sphi 0, %s220
      %s221 = sphi 0, %s218
      %s222 = sphi 0, %s221
      %s238 = sphi 0, %s222
    $region4: #{tpu_custom_call.1} parent=1 // loop_header_branch
      %29 = sbr.rel (%p27) target = $region8
    $region5: #{tpu_custom_call.1} parent=1 // loop_body
      %s31 = ssub.s32 %s26, 1
      %s32 = ssub.s32 %s26, 2
      %s39 = sadd.s32 1, %s34
      %p40 = scmp.ge.s32.totalorder %s39, 1
      %s41 = scalar_select %p40, 0, %s39
      %s42 = sadd.s32 1, %s33
      %s43 = scalar_select %p40, %s42, %s33
      %p44 = scmp.ge.s32.totalorder %s43, 2
      %s45 = scalar_select %p44, 0, %s43
      %s46 = ssub.s32 %s33, %s45
      %s47 = ssub.s32 %s34, %s41
      %s48 = sor.u32 %s46, %s47
      %p49 = scmp.eq.s32.totalorder %s48, 0
      %s51 = sadd.s32 %s50, 1
      %s52 = scalar_select %p49, %s50, %s51
      %p55 = pneg %p49
      %p56 = scmp.eq.s32.totalorder %s26, 1
      %p57 = por %p55, %p56
      %p58 = scmp.ne.s32.totalorder %s50, %s53
      %p59 = scmp.eq.s32.totalorder %s26, 0
      %p60 = por %p58, %p59
      %p61 = scmp.ne.s32.totalorder %s50, %s53
      %p62 = scmp.eq.s32.totalorder %s31, 1
      %p63 = por %p61, %p62
      %p64 = scmp.ne.s32.totalorder %s53, %s54
      %p65 = scmp.eq.s32.totalorder %s31, 0
      %p66 = por %p64, %p65
      %p67 = scmp.ne.s32.totalorder %s53, %s54
      %p68 = scmp.eq.s32.totalorder %s32, 1
      %p69 = por %p67, %p68
      %p71 = scmp.ne.s32.totalorder %s54, %s70
      %p72 = scmp.eq.s32.totalorder %s32, 0
      %p73 = por %p71, %p72
      %s74 = ssub.s32 %s33, %s45
      %s75 = ssub.s32 %s34, %s41
      %s76 = sor.u32 %s74, %s75
      %p77 = scmp.eq.s32.totalorder %s76, 0
      %s79 = sadd.s32 %s78, 1
      %s80 = scalar_select %p77, %s78, %s79
      %p83 = pneg %p77
      %p84 = scmp.eq.s32.totalorder %s26, 1
      %p85 = por %p83, %p84
      %p86 = scmp.ne.s32.totalorder %s78, %s81
      %p87 = scmp.eq.s32.totalorder %s26, 0
      %p88 = por %p86, %p87
      %p89 = scmp.ne.s32.totalorder %s78, %s81
      %p90 = scmp.eq.s32.totalorder %s31, 1
      %p91 = por %p89, %p90
      %p92 = scmp.ne.s32.totalorder %s81, %s82
      %p93 = scmp.eq.s32.totalorder %s31, 0
      %p94 = por %p92, %p93
      %p95 = scmp.ne.s32.totalorder %s81, %s82
      %p96 = scmp.eq.s32.totalorder %s32, 1
      %p97 = por %p95, %p96
      %p99 = scmp.ne.s32.totalorder %s82, %s98
      %p100 = scmp.eq.s32.totalorder %s32, 0
      %p101 = por %p99, %p100
      %s103 = sadd.s32 %s102, 1
      %p106 = scmp.eq.s32.totalorder %s26, 1
      %p107 = scmp.ne.s32.totalorder %s102, %s104
      %p108 = scmp.eq.s32.totalorder %s26, 0
      %p109 = por %p107, %p108
      %p110 = scmp.ne.s32.totalorder %s102, %s104
      %p111 = scmp.eq.s32.totalorder %s31, 1
      %p112 = por %p110, %p111
      %p113 = scmp.ne.s32.totalorder %s104, %s105
      %p114 = scmp.eq.s32.totalorder %s31, 0
      %p115 = por %p113, %p114
      %p116 = scmp.ne.s32.totalorder %s104, %s105
      %p117 = scmp.eq.s32.totalorder %s32, 1
      %p118 = por %p116, %p117
      %p120 = scmp.ne.s32.totalorder %s105, %s119
      %p121 = scmp.eq.s32.totalorder %s32, 0
      %p122 = por %p120, %p121
      %s124 = sadd.s32 %s123, 1
      %p127 = scmp.eq.s32.totalorder %s26, 1
      %p128 = scmp.ne.s32.totalorder %s123, %s125
      %p129 = scmp.eq.s32.totalorder %s26, 0
      %p130 = por %p128, %p129
      %p131 = scmp.ne.s32.totalorder %s123, %s125
      %p132 = scmp.eq.s32.totalorder %s31, 1
      %p133 = por %p131, %p132
      %p134 = scmp.ne.s32.totalorder %s125, %s126
      %p135 = scmp.eq.s32.totalorder %s31, 0
      %p136 = por %p134, %p135
      %p137 = scmp.ne.s32.totalorder %s125, %s126
      %p138 = scmp.eq.s32.totalorder %s32, 1
      %p139 = por %p137, %p138
      %p141 = scmp.ne.s32.totalorder %s126, %s140
      %p142 = scmp.eq.s32.totalorder %s32, 0
      %p143 = por %p141, %p142
      %s145 = sadd.s32 %s144, 1
      %p148 = scmp.eq.s32.totalorder %s26, 1
      %p149 = scmp.ne.s32.totalorder %s144, %s146
      %p150 = scmp.eq.s32.totalorder %s26, 0
      %p151 = por %p149, %p150
      %p152 = scmp.ne.s32.totalorder %s144, %s146
      %p153 = scmp.eq.s32.totalorder %s31, 1
      %p154 = por %p152, %p153
      %p155 = scmp.ne.s32.totalorder %s146, %s147
      %p156 = scmp.eq.s32.totalorder %s31, 0
      %p157 = por %p155, %p156
      %p158 = scmp.ne.s32.totalorder %s146, %s147
      %p159 = scmp.eq.s32.totalorder %s32, 1
      %p160 = por %p158, %p159
      %p162 = scmp.ne.s32.totalorder %s147, %s161
      %p163 = scmp.eq.s32.totalorder %s32, 0
      %p164 = por %p162, %p163
      %s166 = sadd.s32 %s165, 1
      %p169 = scmp.eq.s32.totalorder %s26, 1
      %p170 = scmp.ne.s32.totalorder %s165, %s167
      %p171 = scmp.eq.s32.totalorder %s26, 0
      %p172 = por %p170, %p171
      %p173 = scmp.ne.s32.totalorder %s165, %s167
      %p174 = scmp.eq.s32.totalorder %s31, 1
      %p175 = por %p173, %p174
      %p176 = scmp.ne.s32.totalorder %s167, %s168
      %p177 = scmp.eq.s32.totalorder %s31, 0
      %p178 = por %p176, %p177
      %p179 = scmp.ne.s32.totalorder %s167, %s168
      %p180 = scmp.eq.s32.totalorder %s32, 1
      %p181 = por %p179, %p180
      %p183 = scmp.ne.s32.totalorder %s168, %s182
      %p184 = scmp.eq.s32.totalorder %s32, 0
      %p185 = por %p183, %p184
      %s186 = ssub.s32 %s33, %s45
      %s187 = ssub.s32 %s34, %s41
      %s188 = sor.u32 %s186, %s187
      %p189 = scmp.eq.s32.totalorder %s188, 0
      %s191 = sadd.s32 %s190, 1
      %s192 = scalar_select %p189, %s190, %s191
      %p195 = pneg %p189
      %p196 = scmp.eq.s32.totalorder %s26, 1
      %p197 = por %p195, %p196
      %p198 = scmp.ne.s32.totalorder %s190, %s193
      %p199 = scmp.eq.s32.totalorder %s26, 0
      %p200 = por %p198, %p199
      %p201 = scmp.ne.s32.totalorder %s190, %s193
      %p202 = scmp.eq.s32.totalorder %s31, 1
      %p203 = por %p201, %p202
      %p204 = scmp.ne.s32.totalorder %s193, %s194
      %p205 = scmp.eq.s32.totalorder %s31, 0
      %p206 = por %p204, %p205
      %p207 = scmp.ne.s32.totalorder %s193, %s194
      %p208 = scmp.eq.s32.totalorder %s32, 1
      %p209 = por %p207, %p208
      %p211 = scmp.ne.s32.totalorder %s194, %s210
      %p212 = scmp.eq.s32.totalorder %s32, 0
      %p213 = por %p211, %p212
      %s214 = ssub.s32 %s33, %s45
      %s215 = ssub.s32 %s34, %s41
      %s216 = sor.u32 %s214, %s215
      %p217 = scmp.eq.s32.totalorder %s216, 0
      %s219 = sadd.s32 %s218, 1
      %s220 = scalar_select %p217, %s218, %s219
      %p223 = pneg %p217
      %p224 = scmp.eq.s32.totalorder %s26, 1
      %p225 = por %p223, %p224
      %p226 = scmp.ne.s32.totalorder %s218, %s221
      %p227 = scmp.eq.s32.totalorder %s26, 0
      %p228 = por %p226, %p227
      %p229 = scmp.ne.s32.totalorder %s218, %s221
      %p230 = scmp.eq.s32.totalorder %s31, 1
      %p231 = por %p229, %p230
      %p232 = scmp.ne.s32.totalorder %s221, %s222
      %p233 = scmp.eq.s32.totalorder %s31, 0
      %p234 = por %p232, %p233
      %p235 = scmp.ne.s32.totalorder %s221, %s222
      %p236 = scmp.eq.s32.totalorder %s32, 1
      %p237 = por %p235, %p236
      %p239 = scmp.ne.s32.totalorder %s222, %s238
      %p240 = scmp.eq.s32.totalorder %s32, 0
      %p241 = por %p239, %p240
      %p242 = scmp.le.s32.totalorder 1, %s26
      %p243 = scmp.lt.s32.totalorder %s26, 3
      %p244 = pnand %p242, %p243
      %p245 = pneg %p244
      // Predicated region
      $region9: #{tpu_custom_call.1} parent=5 // pred_check
        _
      $region10: #{tpu_custom_call.1} parent=5 // pred_check_branch
        %247 = sbr.rel (%p244) target = $region12
      $region11: #{tpu_custom_call.1} parent=5 // pred_region
        %s248 = ssub.s32 %s26, 1
        // Predicated region
        $region13: #{tpu_custom_call.1} parent=11 // pred_check
          %p249 = pneg %p115
        $region14: #{tpu_custom_call.1} parent=11 // pred_check_branch
          %251 = sbr.rel (%p249) target = $region16
        $region15: #{tpu_custom_call.1} parent=11 // pred_region
          _
        $region16: #{tpu_custom_call.1} parent=11 // pred_fallthru
          _
        // Predicated region
        $region17: #{tpu_custom_call.1} parent=11 // pred_check
          %p252 = pneg %p136
        $region18: #{tpu_custom_call.1} parent=11 // pred_check_branch
          %254 = sbr.rel (%p252) target = $region20
        $region19: #{tpu_custom_call.1} parent=11 // pred_region
          _
        $region20: #{tpu_custom_call.1} parent=11 // pred_fallthru
          _
        // Predicated region
        $region21: #{tpu_custom_call.1} parent=11 // pred_check
          %p255 = pneg %p157
        $region22: #{tpu_custom_call.1} parent=11 // pred_check_branch
          %257 = sbr.rel (%p255) target = $region24
        $region23: #{tpu_custom_call.1} parent=11 // pred_region
          _
        $region24: #{tpu_custom_call.1} parent=11 // pred_fallthru
          _
        // Predicated region
        $region25: #{tpu_custom_call.1} parent=11 // pred_check
          %p258 = pneg %p178
        $region26: #{tpu_custom_call.1} parent=11 // pred_check_branch
          %260 = sbr.rel (%p258) target = $region28
        $region27: #{tpu_custom_call.1} parent=11 // pred_region
          _
        $region28: #{tpu_custom_call.1} parent=11 // pred_fallthru
          _
      $region12: #{tpu_custom_call.1} parent=5 // pred_fallthru
        _
      %p261 = scmp.lt.s32.totalorder %s26, 2
      // Predicated region
      $region29: #{tpu_custom_call.1} parent=5 // pred_check
        %p262 = pneg %p261
      $region30: #{tpu_custom_call.1} parent=5 // pred_check_branch
        %264 = sbr.rel (%p262) target = $region32
      $region31: #{tpu_custom_call.1} parent=5 // pred_region
        // Predicated region
        $region33: #{tpu_custom_call.1} parent=31 // pred_check
          %p265 = pneg %p60
        $region34: #{tpu_custom_call.1} parent=31 // pred_check_branch
          %267 = sbr.rel (%p265) target = $region36
        $region35: #{tpu_custom_call.1} parent=31 // pred_region
          %s268 = sand.u32 %s50, 1
          %s269 = scalar_lea.sflag [#allocation3], %s268
          %s270 = sand.u32 %s50, 1
          %s271 = smul.addr %s270, 8
          %s272 = scalar_lea.vmem [#allocation2], %s271
          %s273 = smul.u32 2, %s34
          %s275 = ssub.s32 128, 128
          %276 = vsyncadd %s269, %s275
          %s277 = smul.addr %s33, 2
          %s278 = sadd.s32 %s273, %s277
          %s279 = smul.addr %s278, 64
          %s280 = scalar_lea.hbm %s0, %s279
          %s282 = sshll.u32 %s272, 4
          %s283 = int_to_ptr.vmem [resolvable:$true] %s282
          %285 = dma.hbm_to_vmem [thread:$0]  %s280, 128, %s283, %s269
        $region36: #{tpu_custom_call.1} parent=31 // pred_fallthru
          _
        // Predicated region
        $region37: #{tpu_custom_call.1} parent=31 // pred_check
          %p286 = pneg %p88
        $region38: #{tpu_custom_call.1} parent=31 // pred_check_branch
          %288 = sbr.rel (%p286) target = $region40
        $region39: #{tpu_custom_call.1} parent=31 // pred_region
          %s289 = sand.u32 %s78, 1
          %s290 = scalar_lea.sflag [#allocation6], %s289
          %s291 = sand.u32 %s78, 1
          %s292 = smul.addr %s291, 8
          %s293 = scalar_lea.vmem [#allocation5], %s292
          %s294 = smul.u32 2, %s34
          %s296 = ssub.s32 128, 128
          %297 = vsyncadd %s290, %s296
          %s298 = smul.addr %s33, 2
          %s299 = sadd.s32 %s294, %s298
          %s300 = smul.addr %s299, 64
          %s301 = scalar_lea.hbm %s1, %s300
          %s303 = sshll.u32 %s293, 4
          %s304 = int_to_ptr.vmem [resolvable:$true] %s303
          %306 = dma.hbm_to_vmem [thread:$0]  %s301, 128, %s304, %s290
        $region40: #{tpu_custom_call.1} parent=31 // pred_fallthru
          _
      $region32: #{tpu_custom_call.1} parent=5 // pred_fallthru
        _
      %p307 = scmp.le.s32.totalorder 1, %s26
      %p308 = scmp.lt.s32.totalorder %s26, 3
      %p309 = pnand %p307, %p308
      %p310 = pneg %p309
      // Predicated region
      $region41: #{tpu_custom_call.1} parent=5 // pred_check
        _
      $region42: #{tpu_custom_call.1} parent=5 // pred_check_branch
        %312 = sbr.rel (%p309) target = $region44
      $region43: #{tpu_custom_call.1} parent=5 // pred_region
        %s313 = ssub.s32 %s26, 1
        %s314 = sand.u32 %s53, 1
        %s315 = scalar_lea.sflag [#allocation3], %s314
        %s316 = sand.u32 %s53, 1
        %s317 = smul.addr %s316, 8
        %s318 = scalar_lea.vmem [#allocation2], %s317
        // Predicated region
        $region45: #{tpu_custom_call.1} parent=43 // pred_check
          %p319 = pneg %p66
        $region46: #{tpu_custom_call.1} parent=43 // pred_check_branch
          %321 = sbr.rel (%p319) target = $region48
        $region47: #{tpu_custom_call.1} parent=43 // pred_region
          %322 = dma.done %s315, 128
        $region48: #{tpu_custom_call.1} parent=43 // pred_fallthru
          _
        %s323 = sand.u32 %s81, 1
        %s324 = scalar_lea.sflag [#allocation6], %s323
        %s325 = sand.u32 %s81, 1
        %s326 = smul.addr %s325, 8
        %s327 = scalar_lea.vmem [#allocation5], %s326
        // Predicated region
        $region49: #{tpu_custom_call.1} parent=43 // pred_check
          %p328 = pneg %p94
        $region50: #{tpu_custom_call.1} parent=43 // pred_check_branch
          %330 = sbr.rel (%p328) target = $region52
        $region51: #{tpu_custom_call.1} parent=43 // pred_region
          %331 = dma.done %s324, 128
        $region52: #{tpu_custom_call.1} parent=43 // pred_fallthru
          _
        %s332 = sand.u32 %s53, 1
        %s333 = scalar_lea.sflag [#allocation3], %s332
        %s334 = sand.u32 %s53, 1
        %s335 = smul.addr %s334, 8
        %s336 = scalar_lea.vmem [#allocation2], %s335
        %p337 = pneg %p66
        %p338 = pneg %p63
        %s339 = sand.u32 %s81, 1
        %s340 = scalar_lea.sflag [#allocation6], %s339
        %s341 = sand.u32 %s81, 1
        %s342 = smul.addr %s341, 8
        %s343 = scalar_lea.vmem [#allocation5], %s342
        %p344 = pneg %p94
        %p345 = pneg %p91
        %p346 = pneg %p115
        %p347 = pneg %p112
        %p348 = pneg %p136
        %p349 = pneg %p133
        %p350 = pneg %p157
        %p351 = pneg %p154
        %p352 = pneg %p178
        %p353 = pneg %p175
        %p354 = pneg %p206
        %p355 = pneg %p203
        %s356 = sand.u32 %s193, 1
        %s357 = scalar_lea.sflag [#allocation4], %s356
        %s358 = sand.u32 %s193, 1
        %s359 = smul.addr %s358, 8
        %s360 = scalar_lea.vmem [#allocation7], %s359
        %p361 = pneg %p234
        %p362 = pneg %p231
        %s363 = sand.u32 %s221, 1
        %s364 = scalar_lea.sflag [#allocation9], %s363
        %s365 = sand.u32 %s221, 1
        %s366 = smul.addr %s365, 8
        %s367 = scalar_lea.vmem [#allocation8], %s366
        %s368 = smul.u32 2, %s36
        %s369 = smul.u32 2, %s36
        %s370 = smul.u32 2, %s36
        %s371 = smul.u32 2, %s36
        %v372 = vld [vmem:[%s318] sm:$0xff]
        %v373 = vld [vmem:[%s327] sm:$0xff]
        %v374 = vld [vmem:[%s2] sm:$0xf]
        %v375 = vld [vmem:[%s4] sm:$0xf]
        %377 = vset.pattern.permute.xlu0 0
        %378 = vperm.xlu0 %377, %v375
        %v379 = vpop.permute.xlu0 %378
        %v382 = vcombine.high %v372, %v372
        %vm383 = vcmask 31744
        %v385 = vsel %vm383, %v374, 0
        %vm387 = vcmask 1043456
        %v388 = vsel %vm387, %v372, 0
        %v390 = vsel %vm387, %v382, 0
        %392 = vmatprep.subr.mxu0 0.0
        %393 = vmatpush1.msra.mxu0 0.0
        %394 = vmatprep.subr.mxu0 0.0
        %395 = vmatpush1.msra.mxu0 0.0
        %396 = vmatprep.subr.mxu0 0.0
        %397 = vmatpush1.msra.mxu0 0.0
        %398 = vmatprep.subr.mxu0 0.0
        %399 = vmatpush1.msra.mxu0 0.0
        %400 = vmatprep.subr.mxu0 0.0
        %401 = vmatpush1.msra.mxu0 0.0
        %402 = vmatprep.subr.mxu0 0.0
        %403 = vmatpush1.msra.mxu0 0.0
        %404 = vmatprep.subr.mxu0 0.0
        %405 = vmatpush1.msra.mxu0 0.0
        %406 = vmatprep.subr.mxu0 0.0
        %407 = vmatpush1.msra.mxu0 0.0
        %408 = vmatprep.subr.mxu0 0.0
        %409 = vmatpush1.msra.mxu0 0.0
        %410 = vmatprep.subr.mxu0 0.0
        %411 = vmatpush1.msra.mxu0 0.0
        %412 = vmatprep.subr.mxu0 0.0
        %413 = vmatpush1.msra.mxu0 0.0
        %414 = vmatprep.subr.mxu0 0.0
        %415 = vmatpush1.msra.mxu0 0.0
        %416 = vmatprep.subr.mxu0 0.0
        %417 = vmatpush1.msra.mxu0 0.0
        %418 = vmatprep.subr.mxu0 0.0
        %419 = vmatpush1.msra.mxu0 0.0
        %420 = vmatprep.subr.mxu0 0.0
        %421 = vmatpush1.msra.mxu0 0.0
        %422 = vmatprep.subr.mxu0 %v390
        %423 = vmatpush1.msra.mxu0 %v388
        %424 = vmatprep.subr.mxu0 0.0
        %425 = vmatpush2.msra.mxu0 0.0
        %426 = vmatprep.subr.mxu0 0.0
        %427 = vmatpush2.msra.mxu0 0.0
        %428 = vmatprep.subr.mxu0 0.0
        %429 = vmatpush2.msra.mxu0 0.0
        %430 = vmatprep.subr.mxu0 0.0
        %431 = vmatpush2.msra.mxu0 0.0
        %432 = vmatprep.subr.mxu0 0.0
        %433 = vmatpush2.msra.mxu0 0.0
        %434 = vmatprep.subr.mxu0 0.0
        %435 = vmatpush2.msra.mxu0 0.0
        %436 = vmatprep.subr.mxu0 0.0
        %437 = vmatpush2.msra.mxu0 0.0
        %438 = vmatprep.subr.mxu0 0.0
        %439 = vmatpush2.msra.mxu0 0.0
        %440 = vmatprep.subr.mxu0 0.0
        %441 = vmatpush2.msra.mxu0 0.0
        %442 = vmatprep.subr.mxu0 0.0
        %443 = vmatpush2.msra.mxu0 0.0
        %444 = vmatprep.subr.mxu0 0.0
        %445 = vmatpush2.msra.mxu0 0.0
        %446 = vmatprep.subr.mxu0 0.0
        %447 = vmatpush2.msra.mxu0 0.0
        %448 = vmatprep.subr.mxu0 0.0
        %449 = vmatpush2.msra.mxu0 0.0
        %450 = vmatprep.subr.mxu0 0.0
        %451 = vmatpush2.msra.mxu0 0.0
        %452 = vmatprep.subr.mxu0 0.0
        %453 = vmatpush2.msra.mxu0 0.0
        %454 = vmatprep.subr.mxu0 0.0
        %455 = vmatpush2.msra.mxu0 0.0
        %456 = vmatprep.mubr.f32.mxu0 0.0
        %457 = vmatmul.mubr.f32.gmra.mxu0 %v385
        %v458 = vpop.f32.mrf.mxu0
        %v459 = vadd.f32 %v379, %v458
        %v460 = vpop.f32.mrf.mxu0
        %v461 = vadd.f32 %v379, %v460
        %462 = vdwg.mxu0
        %v463 = vld [vmem:[%s3] sm:$0xf]
        %v464 = vld [vmem:[%s5] sm:$0xf]
        %466 = vset.pattern.permute.xlu0 0
        %467 = vperm.xlu0 %466, %v464
        %v468 = vpop.permute.xlu0 %467
        %v471 = vcombine.high %v373, %v373
        %v473 = vsel %vm383, %v463, 0
        %v475 = vsel %vm387, %v373, 0
        %v477 = vsel %vm387, %v471, 0
        %479 = vmatprep.subr.mxu0 0.0
        %480 = vmatpush1.msra.mxu0 0.0
        %481 = vmatprep.subr.mxu0 0.0
        %482 = vmatpush1.msra.mxu0 0.0
        %483 = vmatprep.subr.mxu0 0.0
        %484 = vmatpush1.msra.mxu0 0.0
        %485 = vmatprep.subr.mxu0 0.0
        %486 = vmatpush1.msra.mxu0 0.0
        %487 = vmatprep.subr.mxu0 0.0
        %488 = vmatpush1.msra.mxu0 0.0
        %489 = vmatprep.subr.mxu0 0.0
        %490 = vmatpush1.msra.mxu0 0.0
        %491 = vmatprep.subr.mxu0 0.0
        %492 = vmatpush1.msra.mxu0 0.0
        %493 = vmatprep.subr.mxu0 0.0
        %494 = vmatpush1.msra.mxu0 0.0
        %495 = vmatprep.subr.mxu0 0.0
        %496 = vmatpush1.msra.mxu0 0.0
        %497 = vmatprep.subr.mxu0 0.0
        %498 = vmatpush1.msra.mxu0 0.0
        %499 = vmatprep.subr.mxu0 0.0
        %500 = vmatpush1.msra.mxu0 0.0
        %501 = vmatprep.subr.mxu0 0.0
        %502 = vmatpush1.msra.mxu0 0.0
        %503 = vmatprep.subr.mxu0 0.0
        %504 = vmatpush1.msra.mxu0 0.0
        %505 = vmatprep.subr.mxu0 0.0
        %506 = vmatpush1.msra.mxu0 0.0
        %507 = vmatprep.subr.mxu0 0.0
        %508 = vmatpush1.msra.mxu0 0.0
        %509 = vmatprep.subr.mxu0 %v477
        %510 = vmatpush1.msra.mxu0 %v475
        %511 = vmatprep.subr.mxu0 0.0
        %512 = vmatpush2.msra.mxu0 0.0
        %513 = vmatprep.subr.mxu0 0.0
        %514 = vmatpush2.msra.mxu0 0.0
        %515 = vmatprep.subr.mxu0 0.0
        %516 = vmatpush2.msra.mxu0 0.0
        %517 = vmatprep.subr.mxu0 0.0
        %518 = vmatpush2.msra.mxu0 0.0
        %519 = vmatprep.subr.mxu0 0.0
        %520 = vmatpush2.msra.mxu0 0.0
        %521 = vmatprep.subr.mxu0 0.0
        %522 = vmatpush2.msra.mxu0 0.0
        %523 = vmatprep.subr.mxu0 0.0
        %524 = vmatpush2.msra.mxu0 0.0
        %525 = vmatprep.subr.mxu0 0.0
        %526 = vmatpush2.msra.mxu0 0.0
        %527 = vmatprep.subr.mxu0 0.0
        %528 = vmatpush2.msra.mxu0 0.0
        %529 = vmatprep.subr.mxu0 0.0
        %530 = vmatpush2.msra.mxu0 0.0
        %531 = vmatprep.subr.mxu0 0.0
        %532 = vmatpush2.msra.mxu0 0.0
        %533 = vmatprep.subr.mxu0 0.0
        %534 = vmatpush2.msra.mxu0 0.0
        %535 = vmatprep.subr.mxu0 0.0
        %536 = vmatpush2.msra.mxu0 0.0
        %537 = vmatprep.subr.mxu0 0.0
        %538 = vmatpush2.msra.mxu0 0.0
        %539 = vmatprep.subr.mxu0 0.0
        %540 = vmatpush2.msra.mxu0 0.0
        %541 = vmatprep.subr.mxu0 0.0
        %542 = vmatpush2.msra.mxu0 0.0
        %543 = vmatprep.mubr.f32.mxu0 0.0
        %544 = vmatmul.mubr.f32.gmra.mxu0 %v473
        %v545 = vpop.f32.mrf.mxu0
        %v546 = vadd.f32 %v468, %v545
        %v547 = vpop.f32.mrf.mxu0
        %v548 = vadd.f32 %v468, %v547
        %549 = vdwg.mxu0
        %v550 = vmax.f32 %v459, 0.0
        %v551 = vmax.f32 %v461, 0.0
        %v554 = vcombine.low %v550, %v551
        %556 = vst [vmem:[%s360] sm:$0xff] %v554
        %v557 = vmax.f32 %v546, 0.0
        %v558 = vmax.f32 %v548, 0.0
        %v561 = vcombine.low %v557, %v558
        %563 = vst [vmem:[%s367] sm:$0xff] %v561
        %s564 = sand.u32 %s193, 1
        %s565 = scalar_lea.sflag [#allocation4], %s564
        %s566 = sand.u32 %s193, 1
        %s567 = smul.addr %s566, 8
        %s568 = scalar_lea.vmem [#allocation7], %s567
        %s569 = sand.u32 %s221, 1
        %s570 = scalar_lea.sflag [#allocation9], %s569
        %s571 = sand.u32 %s221, 1
        %s572 = smul.addr %s571, 8
        %s573 = scalar_lea.vmem [#allocation8], %s572
        // Predicated region
        $region53: #{tpu_custom_call.1} parent=43 // pred_check
          %p574 = pneg %p203
        $region54: #{tpu_custom_call.1} parent=43 // pred_check_branch
          %576 = sbr.rel (%p574) target = $region56
        $region55: #{tpu_custom_call.1} parent=43 // pred_region
          %s577 = smul.u32 2, %s36
          %s579 = ssub.s32 128, 128
          %580 = vsyncadd %s565, %s579
          %s581 = smul.addr %s35, 2
          %s582 = sadd.s32 %s577, %s581
          %s583 = smul.addr %s582, 64
          %s584 = scalar_lea.hbm %s6, %s583
          %s586 = sshll.u32 %s568, 4
          %s587 = int_to_ptr.vmem [resolvable:$true] %s586
          %589 = dma.vmem_to_hbm [thread:$0]  %s587, 128, %s584, %s565
        $region56: #{tpu_custom_call.1} parent=43 // pred_fallthru
          _
        // Predicated region
        $region57: #{tpu_custom_call.1} parent=43 // pred_check
          %p590 = pneg %p231
        $region58: #{tpu_custom_call.1} parent=43 // pred_check_branch
          %592 = sbr.rel (%p590) target = $region60
        $region59: #{tpu_custom_call.1} parent=43 // pred_region
          %s593 = smul.u32 2, %s36
          %s595 = ssub.s32 128, 128
          %596 = vsyncadd %s570, %s595
          %s597 = smul.addr %s35, 2
          %s598 = sadd.s32 %s593, %s597
          %s599 = smul.addr %s598, 64
          %s600 = scalar_lea.hbm %s7, %s599
          %s602 = sshll.u32 %s573, 4
          %s603 = int_to_ptr.vmem [resolvable:$true] %s602
          %605 = dma.vmem_to_hbm [thread:$0]  %s603, 128, %s600, %s570
        $region60: #{tpu_custom_call.1} parent=43 // pred_fallthru
          _
      $region44: #{tpu_custom_call.1} parent=5 // pred_fallthru
        _
      %p606 = scmp.le.s32.totalorder 2, %s26
      // Predicated region
      $region61: #{tpu_custom_call.1} parent=5 // pred_check
        %p607 = pneg %p606
      $region62: #{tpu_custom_call.1} parent=5 // pred_check_branch
        %609 = sbr.rel (%p607) target = $region64
      $region63: #{tpu_custom_call.1} parent=5 // pred_region
        %s610 = ssub.s32 %s26, 2
        // Predicated region
        $region65: #{tpu_custom_call.1} parent=63 // pred_check
          %p611 = pneg %p209
        $region66: #{tpu_custom_call.1} parent=63 // pred_check_branch
          %613 = sbr.rel (%p611) target = $region68
        $region67: #{tpu_custom_call.1} parent=63 // pred_region
          %s614 = sand.u32 %s194, 1
          %s615 = scalar_lea.sflag [#allocation4], %s614
          %s616 = sand.u32 %s194, 1
          %s617 = smul.addr %s616, 8
          %s618 = scalar_lea.vmem [#allocation7], %s617
          %619 = dma.done %s615, 128
        $region68: #{tpu_custom_call.1} parent=63 // pred_fallthru
          _
        // Predicated region
        $region69: #{tpu_custom_call.1} parent=63 // pred_check
          %p620 = pneg %p237
        $region70: #{tpu_custom_call.1} parent=63 // pred_check_branch
          %622 = sbr.rel (%p620) target = $region72
        $region71: #{tpu_custom_call.1} parent=63 // pred_region
          %s623 = sand.u32 %s222, 1
          %s624 = scalar_lea.sflag [#allocation9], %s623
          %s625 = sand.u32 %s222, 1
          %s626 = smul.addr %s625, 8
          %s627 = scalar_lea.vmem [#allocation8], %s626
          %628 = dma.done %s624, 128
        $region72: #{tpu_custom_call.1} parent=63 // pred_fallthru
          _
      $region64: #{tpu_custom_call.1} parent=5 // pred_fallthru
        _
    $region6: #{tpu_custom_call.1} parent=1 // loop_footer
      %s30 = sadd.s32 1, %s26
    $region7: #{tpu_custom_call.1} parent=1 // loop_footer_branch
      %25 = sbr.rel target = $region3
    $region8: #{tpu_custom_call.1} parent=1 // loop_exit
      _
    %629 = vsyncpa [#allocation3], 1
    %s630 = scalar_lea.sflag [#allocation3], 1
    %631 = vsyncpa %s630, 1
    %632 = vsyncpa [#allocation6], 1
    %s633 = scalar_lea.sflag [#allocation6], 1
    %634 = vsyncpa %s633, 1
    %635 = vsyncpa [#allocation4], 1
    %s636 = scalar_lea.sflag [#allocation4], 1
    %637 = vsyncpa %s636, 1
    %638 = vsyncpa [#allocation9], 1
    %s639 = scalar_lea.sflag [#allocation9], 1
    %640 = vsyncpa %s639, 1

</llo_original>
